<compile_context>
chip_gen: v6e
topology: v6e:2x2x1
jax: 0.10.0
libtpu: 0.0.40
codegen_flags: <defaults>
</compile_context>

<pallas_src>
import functools

import jax
import jax.numpy as jnp
from jax.experimental import pallas as pl
from jax.experimental.pallas import tpu as pltpu


# --------------------------------------------------------------------------
# Path A kernel: whole planes on the sublane axis, flattened H*W on lanes.
# --------------------------------------------------------------------------
def _blur_planes_kernel(idx_ref, x_ref, o_ref, *, h, w):
    hw = h * w
    # Resident (1, HW) column / row indices -> 4 cheap compares instead of
    # per-step iota + mod (perf review: hoist mask math out of the grid loop).
    col = idx_ref[0:1, :]
    row = idx_ref[1:2, :]
    first_col = col == 0
    last_col = col == (w - 1)
    first_row = row == 0
    last_row = row == (h - 1)

    x = x_ref[...].astype(jnp.float32)

    # Horizontal [1,2,1] with reflect edges.  roll(x, s)[k] = x[(k - s) % HW].
    xm1 = pltpu.roll(x, shift=1, axis=1)        # x[k-1]
    xp1 = pltpu.roll(x, shift=hw - 1, axis=1)   # x[k+1]
    left = jnp.where(first_col, xp1, xm1)       # col 0 reflects to col 1
    right = jnp.where(last_col, xm1, xp1)       # col W-1 reflects to col W-2
    hsum = left + (x + x) + right

    # Vertical [1,2,1] with reflect edges (row shift = lane shift by W).
    hup = pltpu.roll(hsum, shift=w, axis=1)       # h[k-W]
    hdn = pltpu.roll(hsum, shift=hw - w, axis=1)  # h[k+W]
    up = jnp.where(first_row, hdn, hup)           # row 0 reflects to row 1
    dn = jnp.where(last_row, hup, hdn)            # row H-1 reflects to row H-2
    o_ref[...] = ((up + (hsum + hsum) + dn) * 0.0625).astype(o_ref.dtype)


# --------------------------------------------------------------------------
# Path B kernel: row-halo tiled, (P, H, W) layout, halo rows via extra specs.
# --------------------------------------------------------------------------
def _blur_rows_kernel(x_ref, up_ref, dn_ref, o_ref, *, w, th):
    j = pl.program_id(1)
    nj = pl.num_programs(1)

    x = x_ref[0].astype(jnp.float32)              # (TH, W)
    u = up_ref[0][7:8, :].astype(jnp.float32)     # global row j*TH - 1 (valid j>0)
    d = dn_ref[0][0:1, :].astype(jnp.float32)     # global row (j+1)*TH (valid j<nj-1)

    col = jax.lax.broadcasted_iota(jnp.int32, (1, w), 1)
    first_col = col == 0
    last_col = col == (w - 1)

    def hpass(a):
        am1 = pltpu.roll(a, shift=1, axis=1)
        ap1 = pltpu.roll(a, shift=w - 1, axis=1)
        left = jnp.where(first_col, ap1, am1)
        right = jnp.where(last_col, am1, ap1)
        return left + (a + a) + right

    h = hpass(x)        # (TH, W)
    h_up = hpass(u)     # (1, W)
    h_dn = hpass(d)     # (1, W)

    hu = pltpu.roll(h, shift=1, axis=0)        # row r -> h[r-1]   (row 0 bogus)
    hd = pltpu.roll(h, shift=th - 1, axis=0)   # row r -> h[r+1]   (row TH-1 bogus)

    row = jax.lax.broadcasted_iota(jnp.int32, (th, 1), 0)
    top_val = jnp.where(j == 0, h[1:2, :], h_up)                     # reflect at global top
    bot_val = jnp.where(j == nj - 1, h[th - 2:th - 1, :], h_dn)      # reflect at global bottom
    up = jnp.where(row == 0, top_val, hu)
    dn = jnp.where(row == th - 1, bot_val, hd)

    o_ref[0] = ((up + (h + h) + dn) * 0.0625).astype(o_ref.dtype)


# --------------------------------------------------------------------------
# Wrapper
# --------------------------------------------------------------------------
def _round_up(a, b):
    return ((a + b - 1) // b) * b


def _vmem_budget_bytes():
    """<= ~75% of physical VMEM; conservative 48 MiB if the query fails."""
    phys = 64 * 2**20
    try:
        phys = int(pltpu.get_tpu_info().vmem_capacity_bytes)
    except Exception:
        pass
    return max(32 * 2**20, min(phys - 16 * 2**20, (phys * 3) // 4))


def _pick_row_block(h, w, in_b, per_elem, usable, target_in_bytes, row_block):
    if row_block is not None:
        d = int(row_block)
        if d % 8 == 0 and h % d == 0 and d <= h // 2:
            return d
        return None
    cands = [d for d in range(8, h // 2 + 1, 8) if h % d == 0]
    fit = [d for d in cands if d * w * per_elem <= usable]
    if not fit:
        return None
    pref = [d for d in fit if d * w * in_b <= target_in_bytes]
    return max(pref) if pref else min(fit)


def _blur_rows(x, th, vmem_limit):
    B, C, H, W = x.shape
    P = B * C
    x3 = x.reshape(P, H, W)
    rb = th // 8
    nrb = H // 8
    kernel = functools.partial(_blur_rows_kernel, w=W, th=th)
    out = pl.pallas_call(
        kernel,
        out_shape=jax.ShapeDtypeStruct((P, H, W), x.dtype),
        grid=(P, H // th),
        in_specs=[
            # main tile
            pl.BlockSpec((1, th, W), lambda i, j: (i, j, 0)),
            # 8-row chunk ending at row j*TH  -> its last row is the "up" halo
            pl.BlockSpec((1, 8, W), lambda i, j: (i, jnp.maximum(j * rb - 1, 0), 0)),
            # 8-row chunk starting at row (j+1)*TH -> its first row is "down"
            pl.BlockSpec((1, 8, W), lambda i, j: (i, jnp.minimum((j + 1) * rb, nrb - 1), 0)),
        ],
        out_specs=pl.BlockSpec((1, th, W), lambda i, j: (i, j, 0)),
        compiler_params=pltpu.CompilerParams(
            dimension_semantics=("parallel", "parallel"),
            vmem_limit_bytes=int(vmem_limit),
        ),
    )(x3, x3, x3)
    return out.reshape(B, C, H, W)


def blur(x, *, max_planes_per_block=None, force_row_tiling=False, row_block=None):
    """Equivalent of Blur().forward(x) for NCHW floating-point input."""
    assert jnp.issubdtype(x.dtype, jnp.floating), "Blur expects a floating dtype"
    B, C, H, W = x.shape
    assert H >= 2 and W >= 2, "reflect padding requires H >= 2 and W >= 2"
    P = B * C
    HW = H * W
    in_b = x.dtype.itemsize

    budget = _vmem_budget_bytes()
    big_vmem = budget >= 90 * 2**20
    target_in_bytes = (8 if big_vmem else 2) * 2**20   # bigger tiles on v5e/v6e

    # dtype-aware VMEM cost model per block element:
    # double-buffered input + output (input dtype) + ~8 f32 block temporaries.
    per_elem = 4 * in_b + 8 * 4
    usable = budget - 2 * 2**20
    plane_in_bytes = HW * in_b

    tb_budget = max(usable // (HW * per_elem), 0)
    tb_target = max(1, target_in_bytes // max(1, plane_in_bytes))
    tb = min(tb_budget, tb_target, P)
    if max_planes_per_block is not None:
        tb = min(tb, int(max_planes_per_block))
    plane_path_ok = tb >= min(P, 8)

    # Row-halo tiling: needed when a whole-plane block blows the VMEM budget,
    # and preferred when there are few, large planes (>=2 grid blocks for the
    # two v7x TensorCores).
    can_row_tile = (H % 8 == 0) and (H >= 16)
    want_row_tile = force_row_tiling or (not plane_path_ok) or (
        P < 16 and plane_in_bytes >= 2 * 2**20)
    if want_row_tile and can_row_tile:
        th = _pick_row_block(H, W, in_b, per_elem, usable, target_in_bytes, row_block)
        if th is not None:
            return _blur_rows(x, th, budget)

    # ---------------- Path A: whole planes, flattened lane axis --------------
    if not plane_path_ok:
        # TODO(synk): plane too large for the VMEM budget and row tiling not
        # applicable (H % 8 != 0) — falling back to small whole-plane blocks.
        tb = min(P, 8)
    if tb >= P:
        tb = P
        if P >= 16:  # keep >= 2 grid blocks so both v7x TensorCores get work
            tb = _round_up(-(-P // 2), 8)
    else:
        tb = max(8, (tb // 8) * 8)

    # Resident per-lane column / row indices (constant index_map -> fetched once).
    lane = jnp.arange(HW, dtype=jnp.int32)
    idx = jnp.stack([lane % W, lane // W], axis=0)   # (2, HW) int32

    xf = x.reshape(P, HW)                 # free metadata reshape
    n_blocks = pl.cdiv(P, tb)             # partial final block handled by Pallas
    # TODO(synk): for odd W (HW not a multiple of 128) stores are lane-masked;
    # in-block lane padding would be needed if such shapes ever matter.

    kernel = functools.partial(_blur_planes_kernel, h=H, w=W)
    out = pl.pallas_call(
        kernel,
        out_shape=jax.ShapeDtypeStruct((P, HW), x.dtype),
        grid=(n_blocks,),
        in_specs=[
            pl.BlockSpec((2, HW), lambda i: (0, 0)),      # resident indices
            pl.BlockSpec((tb, HW), lambda i: (i, 0)),
        ],
        out_specs=pl.BlockSpec((tb, HW), lambda i: (i, 0)),
        compiler_params=pltpu.CompilerParams(
            dimension_semantics=("parallel",),
            vmem_limit_bytes=int(budget),
        ),
    )(idx, xf)
    return out.reshape(B, C, H, W)


# --------------------------------------------------------------------------
# Plain-JAX reference (direct 9-tap shifted sum with reflect pad)
# --------------------------------------------------------------------------
def _blur_ref(x):
    B, C, H, W = x.shape
    f = jnp.array([1.0, 2.0, 1.0], dtype=jnp.float32)
    k = f[None, :] * f[:, None]
    k = k / jnp.sum(k)
    xp = jnp.pad(x, ((0, 0), (0, 0), (1, 1), (1, 1)), mode="reflect")
    acc = jnp.zeros(x.shape, jnp.float32)
    for dy in range(3):
        for dx in range(3):
            acc = acc + k[dy, dx] * xp[:, :, dy:dy + H, dx:dx + W]
    return acc.astype(x.dtype)


if __name__ == "__main__":
    key = jax.random.PRNGKey(0)
    ks = jax.random.split(key, 5)

    # 1) primary shape from the module spec (single-block plane path)
    x = jax.random.normal(ks[0], (2, 4, 16, 16), dtype=jnp.float32)
    y = jax.block_until_ready(blur(x))
    assert y.shape == x.shape and y.dtype == x.dtype
    assert jnp.allclose(y, _blur_ref(x), atol=1e-5, rtol=1e-5)

    # 2) multi-block plane path (grid = 2, exact division)
    x2 = jax.random.normal(ks[1], (2, 8, 16, 16), dtype=jnp.float32)
    y2 = jax.block_until_ready(blur(x2, max_planes_per_block=8))
    assert jnp.allclose(y2, _blur_ref(x2), atol=1e-5, rtol=1e-5)

    # 3) partial final block (P=12, tb=8): no HBM pad/slice copies
    x3 = jax.random.normal(ks[2], (3, 4, 16, 16), dtype=jnp.float32)
    y3 = jax.block_until_ready(blur(x3, max_planes_per_block=8))
    assert jnp.allclose(y3, _blur_ref(x3), atol=1e-5, rtol=1e-5)

    # 4) row-halo-tiled large-plane path, forced at a small shape
    x4 = jax.random.normal(ks[3], (1, 2, 64, 128), dtype=jnp.float32)
    y4 = jax.block_until_ready(blur(x4, force_row_tiling=True, row_block=16))
    assert jnp.allclose(y4, _blur_ref(x4), atol=1e-5, rtol=1e-5)

    # 5) bf16 input (dtype-aware sizing path)
    x5 = jax.random.normal(ks[4], (2, 4, 16, 16), dtype=jnp.bfloat16)
    y5 = jax.block_until_ready(blur(x5))
    assert y5.dtype == jnp.bfloat16
    assert jnp.allclose(y5.astype(jnp.float32), _blur_ref(x5).astype(jnp.float32),
                        atol=2e-2, rtol=2e-2)

    print("KERNEL_OK")
</pallas_src>

<mosaic_0001>
module attributes {stable_mosaic.version = 11 : i64} {
  func.func @_blur_planes_kernel(%arg0: i32, %arg1: memref<2x256xi32, #tpu.memory_space<vmem>>, %arg2: memref<8x256xf32, #tpu.memory_space<vmem>>, %arg3: memref<8x256xf32, #tpu.memory_space<vmem>>) attributes {dimension_semantics = [#tpu.dimension_semantics<parallel>], iteration_bounds = array<i64: 1>, scalar_prefetch = 0 : i64, scratch_operands = 0 : i64, tpu.core_type = #tpu.core_type<tc>, window_params = [{pipeline_mode = #tpu.pipeline_mode<synchronous>, transform_indices = @transform_0, window_bounds = array<i64: 2, 256>}, {transform_indices = @transform_1, window_bounds = array<i64: 8, 256>}, {transform_indices = @transform_2, window_bounds = array<i64: 8, 256>}]} {
    %c0 = arith.constant 0 : index
    %c0_0 = arith.constant 0 : index
    %0 = vector.load %arg1[%c0, %c0_0] : memref<2x256xi32, #tpu.memory_space<vmem>>, vector<1x256xi32>
    %c1 = arith.constant 1 : index
    %c0_1 = arith.constant 0 : index
    %1 = vector.load %arg1[%c1, %c0_1] : memref<2x256xi32, #tpu.memory_space<vmem>>, vector<1x256xi32>
    %c0_i32 = arith.constant 0 : i32
    %2 = vector.broadcast %c0_i32 : i32 to vector<1x256xi32>
    %3 = arith.cmpi eq, %0, %2 : vector<1x256xi32>
    %c15_i32 = arith.constant 15 : i32
    %4 = vector.broadcast %c15_i32 : i32 to vector<1x256xi32>
    %5 = arith.cmpi eq, %0, %4 : vector<1x256xi32>
    %c0_i32_2 = arith.constant 0 : i32
    %6 = vector.broadcast %c0_i32_2 : i32 to vector<1x256xi32>
    %7 = arith.cmpi eq, %1, %6 : vector<1x256xi32>
    %c15_i32_3 = arith.constant 15 : i32
    %8 = vector.broadcast %c15_i32_3 : i32 to vector<1x256xi32>
    %9 = arith.cmpi eq, %1, %8 : vector<1x256xi32>
    %c0_4 = arith.constant 0 : index
    %c0_5 = arith.constant 0 : index
    %10 = vector.load %arg2[%c0_4, %c0_5] : memref<8x256xf32, #tpu.memory_space<vmem>>, vector<8x256xf32>
    %c1_i32 = arith.constant 1 : i32
    %11 = tpu.dynamic_rotate %10 by %c1_i32 dim 1 : vector<8x256xf32>, i32 -> vector<8x256xf32>
    %c255_i32 = arith.constant 255 : i32
    %12 = tpu.dynamic_rotate %10 by %c255_i32 dim 1 : vector<8x256xf32>, i32 -> vector<8x256xf32>
    %13 = vector.shape_cast %3 : vector<1x256xi1> to vector<1x256xi1>
    %14 = vector.broadcast %13 : vector<1x256xi1> to vector<8x256xi1>
    %15 = arith.select %14, %12, %11 : vector<8x256xi1>, vector<8x256xf32>
    %16 = vector.shape_cast %5 : vector<1x256xi1> to vector<1x256xi1>
    %17 = vector.broadcast %16 : vector<1x256xi1> to vector<8x256xi1>
    %18 = arith.select %17, %11, %12 : vector<8x256xi1>, vector<8x256xf32>
    %19 = arith.addf %10, %10 : vector<8x256xf32>
    %20 = arith.addf %15, %19 : vector<8x256xf32>
    %21 = arith.addf %20, %18 : vector<8x256xf32>
    %c16_i32 = arith.constant 16 : i32
    %22 = tpu.dynamic_rotate %21 by %c16_i32 dim 1 : vector<8x256xf32>, i32 -> vector<8x256xf32>
    %c240_i32 = arith.constant 240 : i32
    %23 = tpu.dynamic_rotate %21 by %c240_i32 dim 1 : vector<8x256xf32>, i32 -> vector<8x256xf32>
    %24 = vector.shape_cast %7 : vector<1x256xi1> to vector<1x256xi1>
    %25 = vector.broadcast %24 : vector<1x256xi1> to vector<8x256xi1>
    %26 = arith.select %25, %23, %22 : vector<8x256xi1>, vector<8x256xf32>
    %27 = vector.shape_cast %9 : vector<1x256xi1> to vector<1x256xi1>
    %28 = vector.broadcast %27 : vector<1x256xi1> to vector<8x256xi1>
    %29 = arith.select %28, %22, %23 : vector<8x256xi1>, vector<8x256xf32>
    %30 = arith.addf %21, %21 : vector<8x256xf32>
    %31 = arith.addf %26, %30 : vector<8x256xf32>
    %32 = arith.addf %31, %29 : vector<8x256xf32>
    %cst = arith.constant 6.250000e-02 : f32
    %33 = vector.broadcast %cst : f32 to vector<8x256xf32>
    %34 = arith.mulf %32, %33 : vector<8x256xf32>
    %c0_6 = arith.constant 0 : index
    %c0_7 = arith.constant 0 : index
    %35 = vector.load %arg3[%c0_6, %c0_7] : memref<8x256xf32, #tpu.memory_space<vmem>>, vector<8x256xf32>
    tpu.vector_store %arg3[%c0_6, %c0_7], %34 {strides = array<i32>} : memref<8x256xf32, #tpu.memory_space<vmem>>, vector<8x256xf32>,
    return
  }
  func.func @transform_0(%arg0: i32) -> (i32, i32) {
    %c0_i32 = arith.constant 0 : i32
    %c0_i32_0 = arith.constant 0 : i32
    %c0_i32_1 = arith.constant 0 : i32
    return %c0_i32, %c0_i32_0 : i32, i32
  }
  func.func @transform_1(%arg0: i32) -> (i32, i32) {
    %c0_i32 = arith.constant 0 : i32
    %c0_i32_0 = arith.constant 0 : i32
    return %arg0, %c0_i32 : i32, i32
  }
  func.func @transform_2(%arg0: i32) -> (i32, i32) {
    %c0_i32 = arith.constant 0 : i32
    %c0_i32_0 = arith.constant 0 : i32
    return %arg0, %c0_i32 : i32, i32
  }
}

</mosaic_0001>

<llo_original>
// kernel: tpu_custom_call.1
$region0: #{tpu_custom_call.1}
  #allocation0 [shape = 'u32[]', space=smem, size = 0x4, offset = 0x4, fixed_abs, tag = 'smem constant byte address 0x4 - core index']
  #allocation1 [shape = 'u32[144,128]{1,0:T(1,128)}', space=vmem, size = 0x12000, scoped, tag = 'internal scratch']
  %s0 = inlined_call_operand.hbm [shape: s32[2,256], index: 0, kind: input, shape index: {}]
  %s1 = inlined_call_operand.hbm [shape: f32[8,256], index: 1, kind: input, shape index: {}]
  %s2 = inlined_call_operand.hbm [shape: f32[8,256], index: 2, kind: output, shape index: {}]
  %s3 = sld [smem:[#allocation0]]
  $region26: #{tpu_custom_call.1} parent=0
    _
  %s5 = ssub.s32 1, %s3
  %s6 = scalar_select 0, %s5, %s3
  $region1: #{tpu_custom_call.1} parent=0
    #allocation2 [shape = 'u8[2048]{0}', space=vmem, size = 0x800, scoped, tag = 'input window, operand 0, single buffered']
    #allocation3 [shape = 's32[1]{0}', space=sflag, size = 0x4, scoped, tag = 'scoped memory for tpu_custom_call.1']
    #allocation4 [shape = 's32[1]{0}', space=sflag, size = 0x4, scoped, tag = 'scoped memory for tpu_custom_call.1']
    #allocation5 [shape = 'u8[8192]{0}', space=vmem, size = 0x2000, scoped, tag = 'input window, operand 1, single buffered']
    #allocation6 [shape = 's32[1]{0}', space=sflag, size = 0x4, scoped, tag = 'scoped memory for tpu_custom_call.1']
    #allocation7 [shape = 'u8[8192]{0}', space=vmem, size = 0x2000, scoped, tag = 'output window, operand 0, single buffered']
    %7 = vsyncpa [#allocation3], 0
    %8 = vsyncpa [#allocation6], 0
    %9 = vsyncpa [#allocation4], 0
    // Predicated region
    $region2: #{tpu_custom_call.1} parent=1 // pred_check
      _
    $region3: #{tpu_custom_call.1} parent=1 // pred_check_branch
      %11 = sbr.rel (0) target = $region5
    $region4: #{tpu_custom_call.1} parent=1 // pred_region
      %s13 = ssub.s32 64, 64
      %14 = vsyncadd [#allocation3], %s13
      %s16 = sshll.u32 [#allocation2], 4
      %s17 = int_to_ptr.vmem [resolvable:$true] %s16
      %19 = dma.hbm_to_vmem [thread:$0]  %s0, 64, %s17, [#allocation3]
    $region5: #{tpu_custom_call.1} parent=1 // pred_fallthru
      _
    // Predicated region
    $region6: #{tpu_custom_call.1} parent=1 // pred_check
      _
    $region7: #{tpu_custom_call.1} parent=1 // pred_check_branch
      %21 = sbr.rel (0) target = $region9
    $region8: #{tpu_custom_call.1} parent=1 // pred_region
      %s23 = ssub.s32 256, 256
      %24 = vsyncadd [#allocation6], %s23
      %s26 = sshll.u32 [#allocation5], 4
      %s27 = int_to_ptr.vmem [resolvable:$true] %s26
      %29 = dma.hbm_to_vmem [thread:$0]  %s1, 256, %s27, [#allocation6]
    $region9: #{tpu_custom_call.1} parent=1 // pred_fallthru
      _
    // Predicated region
    $region10: #{tpu_custom_call.1} parent=1 // pred_check
      _
    $region11: #{tpu_custom_call.1} parent=1 // pred_check_branch
      %31 = sbr.rel (0) target = $region13
    $region12: #{tpu_custom_call.1} parent=1 // pred_region
      %32 = dma.done [#allocation3], 64
    $region13: #{tpu_custom_call.1} parent=1 // pred_fallthru
      _
    // Predicated region
    $region14: #{tpu_custom_call.1} parent=1 // pred_check
      _
    $region15: #{tpu_custom_call.1} parent=1 // pred_check_branch
      %34 = sbr.rel (0) target = $region17
    $region16: #{tpu_custom_call.1} parent=1 // pred_region
      %35 = dma.done [#allocation6], 256
    $region17: #{tpu_custom_call.1} parent=1 // pred_fallthru
      _
    %v36 = vld [vmem:[#allocation2] ss:$2 sm:$0x3]
    %s37 = scalar_lea.vmem [#allocation2], 1
    %v38 = vld [vmem:[%s37] ss:$2 sm:$0x3]
    %vm39 = vcmp.eq.s32.totalorder %v36, 0
    %vm40 = vcmp.eq.s32.totalorder %v36, 15
    %vm41 = vcmp.eq.s32.totalorder %v38, 0
    %vm42 = vcmp.eq.s32.totalorder %v38, 15
    %v43 = vld [vmem:[#allocation5] sm:$0xff]
    %v44 = vld [vmem:[#allocation5 + $0x8] sm:$0xff]
    %45 = vrot.lane.b32.xlu0 %v43, 1
    %v46 = vpop.permute.xlu0 %45
    %47 = vrot.lane.b32.xlu0 %v44, 1
    %v48 = vpop.permute.xlu0 %47
    %v49 = vlaneseq
    %v50 = vand.u32 %v49, 127
    %vm51 = vcmp.lt.s32.totalorder %v50, 1
    %v52 = vsel %vm51, %v46, %v48
    %v53 = vsel %vm51, %v48, %v46
    %54 = vrot.lane.b32.xlu0 %v43, 127
    %v55 = vpop.permute.xlu0 %54
    %56 = vrot.lane.b32.xlu0 %v44, 127
    %v57 = vpop.permute.xlu0 %56
    %vm58 = vcmp.lt.s32.totalorder %v50, 127
    %v59 = vsel %vm58, %v55, %v57
    %v60 = vsel %vm58, %v57, %v55
    %v61 = vsel %vm39, 1, 0
    %v62 = vlaneseq
    %v63 = vshrl.u32 %v62, 7
    %v64 = vsub.s32 0, %v63
    %v65 = vrot.slane %v61, %v64
    %v66 = vlaneseq
    %v67 = vshrl.u32 %v66, 7
    %v68 = vsub.s32 1, %v67
    %v69 = vrot.slane %v61, %v68
    %vm70 = vcmp.eq.s32.totalorder %v65, 1
    %vm71 = vcmp.eq.s32.totalorder %v69, 1
    %v72 = vsel %vm70, %v59, %v53
    %v73 = vsel %vm71, %v60, %v52
    %v74 = vsel %vm40, 1, 0
    %v75 = vlaneseq
    %v76 = vshrl.u32 %v75, 7
    %v77 = vsub.s32 0, %v76
    %v78 = vrot.slane %v74, %v77
    %v79 = vlaneseq
    %v80 = vshrl.u32 %v79, 7
    %v81 = vsub.s32 1, %v80
    %v82 = vrot.slane %v74, %v81
    %vm83 = vcmp.eq.s32.totalorder %v78, 1
    %vm84 = vcmp.eq.s32.totalorder %v82, 1
    %v85 = vsel %vm83, %v53, %v59
    %v86 = vsel %vm84, %v52, %v60
    %v87 = vadd.f32 %v43, %v43
    %v88 = vadd.f32 %v44, %v44
    %v89 = vadd.f32 %v72, %v87
    %v90 = vadd.f32 %v73, %v88
    %v91 = vadd.f32 %v89, %v85
    %v92 = vadd.f32 %v90, %v86
    %93 = vrot.lane.b32.xlu0 %v91, 16
    %v94 = vpop.permute.xlu0 %93
    %95 = vrot.lane.b32.xlu0 %v92, 16
    %v96 = vpop.permute.xlu0 %95
    %vm97 = vcmp.lt.s32.totalorder %v50, 16
    %v98 = vsel %vm97, %v94, %v96
    %v99 = vsel %vm97, %v96, %v94
    %100 = vrot.lane.b32.xlu0 %v91, 112
    %v101 = vpop.permute.xlu0 %100
    %102 = vrot.lane.b32.xlu0 %v92, 112
    %v103 = vpop.permute.xlu0 %102
    %vm104 = vcmp.lt.s32.totalorder %v50, 112
    %v105 = vsel %vm104, %v101, %v103
    %v106 = vsel %vm104, %v103, %v101
    %v107 = vsel %vm41, 1, 0
    %v108 = vlaneseq
    %v109 = vshrl.u32 %v108, 7
    %v110 = vsub.s32 0, %v109
    %v111 = vrot.slane %v107, %v110
    %v112 = vlaneseq
    %v113 = vshrl.u32 %v112, 7
    %v114 = vsub.s32 1, %v113
    %v115 = vrot.slane %v107, %v114
    %vm116 = vcmp.eq.s32.totalorder %v111, 1
    %vm117 = vcmp.eq.s32.totalorder %v115, 1
    %v118 = vsel %vm116, %v105, %v99
    %v119 = vsel %vm117, %v106, %v98
    %v120 = vsel %vm42, 1, 0
    %v121 = vlaneseq
    %v122 = vshrl.u32 %v121, 7
    %v123 = vsub.s32 0, %v122
    %v124 = vrot.slane %v120, %v123
    %v125 = vlaneseq
    %v126 = vshrl.u32 %v125, 7
    %v127 = vsub.s32 1, %v126
    %v128 = vrot.slane %v120, %v127
    %vm129 = vcmp.eq.s32.totalorder %v124, 1
    %vm130 = vcmp.eq.s32.totalorder %v128, 1
    %v131 = vsel %vm129, %v99, %v105
    %v132 = vsel %vm130, %v98, %v106
    %v133 = vadd.f32 %v91, %v91
    %v134 = vadd.f32 %v92, %v92
    %v135 = vadd.f32 %v118, %v133
    %v136 = vadd.f32 %v119, %v134
    %v137 = vadd.f32 %v135, %v131
    %v138 = vadd.f32 %v136, %v132
    %v139 = vmul.f32 %v137, 0.0625
    %v140 = vmul.f32 %v138, 0.0625
    %141 = vst [vmem:[#allocation7] sm:$0xff] %v139
    %142 = vst [vmem:[#allocation7 + $0x8] sm:$0xff] %v140
    // Predicated region
    $region18: #{tpu_custom_call.1} parent=1 // pred_check
      _
    $region19: #{tpu_custom_call.1} parent=1 // pred_check_branch
      %144 = sbr.rel (0) target = $region21
    $region20: #{tpu_custom_call.1} parent=1 // pred_region
      %s146 = ssub.s32 256, 256
      %147 = vsyncadd [#allocation4], %s146
      %s149 = sshll.u32 [#allocation7], 4
      %s150 = int_to_ptr.vmem [resolvable:$true] %s149
      %152 = dma.vmem_to_hbm [thread:$0]  %s150, 256, %s2, [#allocation4]
    $region21: #{tpu_custom_call.1} parent=1 // pred_fallthru
      _
    // Predicated region
    $region22: #{tpu_custom_call.1} parent=1 // pred_check
      _
    $region23: #{tpu_custom_call.1} parent=1 // pred_check_branch
      %154 = sbr.rel (0) target = $region25
    $region24: #{tpu_custom_call.1} parent=1 // pred_region
      %155 = dma.done [#allocation4], 256
    $region25: #{tpu_custom_call.1} parent=1 // pred_fallthru
      _
    %156 = vsyncpa [#allocation3], 1
    %157 = vsyncpa [#allocation6], 1
    %158 = vsyncpa [#allocation4], 1

</llo_original>
